<compile_context>
chip_gen: v5e
topology: v5e:2x2
jax: 0.10.0
libtpu: 0.0.40
codegen_flags: <defaults>
</compile_context>

<pallas_src>
import functools

import jax
import jax.numpy as jnp
from jax import lax
from jax.experimental import pallas as pl
from jax.experimental.pallas import tpu as pltpu


def _ytnet_kernel(tc, xt_ref, w1t_ref, w2t_ref, pack_ref, b3_ref, o_ref):
    """One grid step: a (din, tb) slab of x^T -> a (1, tb) slab of the output."""
    # Weights / small params: VMEM-resident across the grid (constant index_maps).
    w1t = w1t_ref[...]                        # (H, din)  bf16
    w2t = w2t_ref[...]                        # (H, H)    bf16
    pack = pack_ref[...]                      # (H, 3)    f32: [b1 | b2 | w3]
    b1 = pack[:, 0:1]                         # (H, 1)
    b2 = pack[:, 1:2]                         # (H, 1)
    w3 = pack[:, 2:3]                         # (H, 1)
    b3 = b3_ref[0, 0]                         # scalar (SMEM)

    tb = xt_ref.shape[1]
    n_chunks = tb // tc

    def chunk(c, carry):
        off = pl.multiple_of(c * tc, 128)
        # Cast the streamed chunk to bf16 for the MXU (free VPU cast).
        xc = xt_ref[:, pl.ds(off, tc)].astype(jnp.bfloat16)          # (din, tc)
        # Layer 1 (MXU, K=din): (H, din) @ (din, tc) -> (H, tc) f32 accum.
        z1 = jnp.dot(w1t, xc, preferred_element_type=jnp.float32) + b1
        h1 = jnp.tanh(z1)                                            # (H, tc) f32
        # Layer 2 (MXU, K=H): (H, H) @ (H, tc) -> (H, tc) f32 accum.
        z2 = jnp.dot(w2t, h1.astype(jnp.bfloat16),
                     preferred_element_type=jnp.float32) + b2
        h2 = jnp.tanh(z2)                                            # (H, tc) f32
        # Layer 3 on VPU + XLU: scale by the w3 column, reduce over sublanes.
        y = jnp.sum(h2 * w3, axis=0, keepdims=True) + b3             # (1, tc)
        o_ref[:, pl.ds(off, tc)] = y.astype(o_ref.dtype)             # lane-dense
        return carry

    # Unrolled inner loop: bounds vreg live ranges + gives the scheduler
    # visibility across the short fixed trip count.
    lax.fori_loop(0, n_chunks, chunk, 0, unroll=True)


def ytnet_forward(x, params, *, tb=2048, tc=512, input_transposed=False):
    """Forward pass of Ytnet.

    x: (N, dim+1) float32, or (dim+1, N) with input_transposed=True (skips the
       wrapper-side transpose copy).  Returns (N, 1) float32 -- same semantics
       as the PyTorch module.
    """
    if input_transposed:
        xt = x
        din, N = xt.shape
    else:
        N, din = x.shape
        # Single wrapper-side transpose, no pad.  Producers holding x in
        # (din, N) layout should pass input_transposed=True to avoid it.
        xt = x.T

    H = params["w1"].shape[1]
    assert tb % 128 == 0 and tc % 128 == 0 and tb % tc == 0

    # Don't over-block tiny batches; keep tb a multiple of tc.
    tb = min(tb, -(-N // tc) * tc)
    G = pl.cdiv(N, tb)      # ragged last tile handled by clamped DMA + post-slice
    # NOTE(v7x): keep G even so the "parallel" axis splits evenly across both
    # TensorCores; tb can be pushed to 4096-8192 there (VMEM is not binding).

    # One-time (tiny) weight prep: bf16 MXU operands, merged small params.
    w1t = params["w1"].T.astype(jnp.bfloat16)                     # (H, din)
    w2t = params["w2"].T.astype(jnp.bfloat16)                     # (H, H)
    pack = jnp.stack(
        [params["b1"], params["b2"], params["w3"][:, 0]], axis=1
    ).astype(jnp.float32)                                         # (H, 3)
    b3 = params["b3"].reshape(1, 1).astype(jnp.float32)           # SMEM scalar
    # TODO(synk): b1/b2 could be folded into the matmuls by appending a ones row
    # to x^T (K=5->6 is free on the MXU); skipped since the VPU broadcast+add is
    # not the saturating unit for this network.

    out = pl.pallas_call(
        functools.partial(_ytnet_kernel, tc),
        out_shape=jax.ShapeDtypeStruct((1, G * tb), jnp.float32),
        grid_spec=pltpu.PrefetchScalarGridSpec(
            num_scalar_prefetch=0,
            grid=(G,),
            in_specs=[
                # Only the x^T tile streams in the steady state.  (If xprof
                # still shows exposed input DMA after enlarging tb, add
                # pipeline_mode=pl.Buffered(3) here.)
                pl.BlockSpec((din, tb), lambda i: (0, i)),
                # Constant block index -> fetched once, VMEM-resident.
                pl.BlockSpec(w1t.shape, lambda i: (0, 0)),
                pl.BlockSpec(w2t.shape, lambda i: (0, 0)),
                pl.BlockSpec(pack.shape, lambda i: (0, 0)),
                # Single scalar bias lives in SMEM.
                pl.BlockSpec(memory_space=pltpu.MemorySpace.SMEM),
            ],
            # Lane-dense output slab: unmasked stores.
            out_specs=pl.BlockSpec((1, tb), lambda i: (0, i)),
        ),
        compiler_params=pltpu.CompilerParams(
            dimension_semantics=("parallel",),   # batch axis -> megacore on v7x
        ),
    )(xt, w1t, w2t, pack, b3)

    # (1, G*tb) -> (N, 1): drop the ragged tail, restore the PyTorch layout.
    return out[0, :N].reshape(N, 1)


def init_params(key, dim, num_neurons):
    """PyTorch nn.Linear default init: U(-1/sqrt(fan_in), 1/sqrt(fan_in))."""
    din = dim + 1
    keys = jax.random.split(key, 6)

    def lin(kw, kb, fan_in, fan_out):
        bound = 1.0 / jnp.sqrt(fan_in)
        w = jax.random.uniform(kw, (fan_in, fan_out), jnp.float32, -bound, bound)
        b = jax.random.uniform(kb, (fan_out,), jnp.float32, -bound, bound)
        return w, b

    w1, b1 = lin(keys[0], keys[1], din, num_neurons)
    w2, b2 = lin(keys[2], keys[3], num_neurons, num_neurons)
    w3, b3 = lin(keys[4], keys[5], num_neurons, 1)
    return {"w1": w1, "b1": b1, "w2": w2, "b2": b2, "w3": w3, "b3": b3}


if __name__ == "__main__":
    # pde['dim'] = 4 -> input features = dim + 1 = 5; sim['num_neurons'] = 32
    dim, num_neurons = 4, 32
    key = jax.random.PRNGKey(0)
    kx1, kx2, kp = jax.random.split(key, 3)
    params = init_params(kp, dim, num_neurons)

    def ref_f32(x):                      # exact PyTorch-semantics reference (f32)
        h = jnp.tanh(x @ params["w1"] + params["b1"])
        h = jnp.tanh(h @ params["w2"] + params["b2"])
        return h @ params["w3"] + params["b3"]

    def ref_bf16(x):                     # mirrors the kernel's bf16-MXU numerics
        xb = x.astype(jnp.bfloat16)
        w1 = params["w1"].astype(jnp.bfloat16)
        w2 = params["w2"].astype(jnp.bfloat16)
        h1 = jnp.tanh(jnp.dot(xb, w1, preferred_element_type=jnp.float32)
                      + params["b1"])
        h2 = jnp.tanh(jnp.dot(h1.astype(jnp.bfloat16), w2,
                              preferred_element_type=jnp.float32)
                      + params["b2"])
        return (h2 * params["w3"][:, 0]).sum(axis=1, keepdims=True) + params["b3"]

    # 1) Small tiles: multi-step grid, multi-chunk inner loop, ragged last tile.
    x1 = jax.random.normal(kx1, (300, dim + 1), jnp.float32)
    out1 = jax.block_until_ready(ytnet_forward(x1, params, tb=256, tc=128))
    assert out1.shape == (300, 1)
    assert jnp.allclose(out1, ref_bf16(x1), atol=5e-3, rtol=5e-3)
    assert jnp.allclose(out1, ref_f32(x1), atol=1e-1, rtol=1e-1)

    # 2) Default (large-tile) config via the zero-copy pre-transposed path.
    x2 = jax.random.normal(kx2, (2600, dim + 1), jnp.float32)
    out2 = jax.block_until_ready(
        ytnet_forward(x2.T, params, input_transposed=True))   # tb=2048, tc=512
    assert out2.shape == (2600, 1)
    assert jnp.allclose(out2, ref_bf16(x2), atol=5e-3, rtol=5e-3)
    assert jnp.allclose(out2, ref_f32(x2), atol=1e-1, rtol=1e-1)

    print("KERNEL_OK")
</pallas_src>

<mosaic_0001>
module attributes {stable_mosaic.version = 11 : i64} {
  func.func @_ytnet_kernel(%arg0: i32, %arg1: memref<5x256xf32, #tpu.memory_space<vmem>>, %arg2: memref<32x5xbf16, #tpu.memory_space<vmem>>, %arg3: memref<32x32xbf16, #tpu.memory_space<vmem>>, %arg4: memref<32x3xf32, #tpu.memory_space<vmem>>, %arg5: memref<1x1xf32, #tpu.memory_space<smem>>, %arg6: memref<1x256xf32, #tpu.memory_space<vmem>>) attributes {dimension_semantics = [#tpu.dimension_semantics<parallel>], iteration_bounds = array<i64: 2>, scalar_prefetch = 0 : i64, scratch_operands = 0 : i64, tpu.core_type = #tpu.core_type<tc>, window_params = [{transform_indices = @transform_0, window_bounds = array<i64: 5, 256>}, {pipeline_mode = #tpu.pipeline_mode<synchronous>, transform_indices = @transform_1, window_bounds = array<i64: 32, 5>}, {pipeline_mode = #tpu.pipeline_mode<synchronous>, transform_indices = @transform_2, window_bounds = array<i64: 32, 32>}, {pipeline_mode = #tpu.pipeline_mode<synchronous>, transform_indices = @transform_3, window_bounds = array<i64: 32, 3>}, {transform_indices = @transform_4, window_bounds = array<i64: 1, 1>}, {transform_indices = @transform_5, window_bounds = array<i64: 1, 256>}]} {
    %c0 = arith.constant 0 : index
    %c0_0 = arith.constant 0 : index
    %0 = vector.load %arg2[%c0, %c0_0] : memref<32x5xbf16, #tpu.memory_space<vmem>>, vector<32x5xbf16>
    %c0_1 = arith.constant 0 : index
    %c0_2 = arith.constant 0 : index
    %1 = vector.load %arg3[%c0_1, %c0_2] : memref<32x32xbf16, #tpu.memory_space<vmem>>, vector<32x32xbf16>
    %c0_3 = arith.constant 0 : index
    %c0_4 = arith.constant 0 : index
    %2 = vector.load %arg4[%c0_3, %c0_4] : memref<32x3xf32, #tpu.memory_space<vmem>>, vector<32x3xf32>
    %3 = vector.extract_strided_slice %2 {offsets = [0, 0], sizes = [32, 1], strides = [1, 1]} : vector<32x3xf32> to vector<32x1xf32>
    %4 = vector.extract_strided_slice %2 {offsets = [0, 1], sizes = [32, 1], strides = [1, 1]} : vector<32x3xf32> to vector<32x1xf32>
    %5 = vector.extract_strided_slice %2 {offsets = [0, 2], sizes = [32, 1], strides = [1, 1]} : vector<32x3xf32> to vector<32x1xf32>
    %c0_5 = arith.constant 0 : index
    %c0_6 = arith.constant 0 : index
    %6 = memref.load %arg5[%c0_5, %c0_6] : memref<1x1xf32, #tpu.memory_space<smem>>
    %c0_i32 = arith.constant 0 : i32
    %c128_i32 = arith.constant 128 : i32
    %7 = arith.muli %c0_i32, %c128_i32 : i32
    %8 = tpu.assume_multiple %7, 128 : i32
    %c0_7 = arith.constant 0 : index
    %9 = arith.index_cast %8 : i32 to index
    %10 = vector.load %arg1[%c0_7, %9] : memref<5x256xf32, #tpu.memory_space<vmem>>, vector<5x128xf32>
    %11 = arith.truncf %10 : vector<5x128xf32> to vector<5x128xbf16>
    %cst = arith.constant dense<0.000000e+00> : vector<32x128xf32>
    %12 = tpu.matmul %0, %11, %cst {dimension_numbers = #tpu.dot_dimension_numbers<[1], [0], [0], [1], [0, 0, 1, 1], [], []>} : vector<32x5xbf16>, vector<5x128xbf16>, vector<32x128xf32> -> vector<32x128xf32>
    %13 = vector.broadcast %3 : vector<32x1xf32> to vector<32x128xf32>
    %14 = arith.addf %12, %13 : vector<32x128xf32>
    %15 = math.tanh %14 : vector<32x128xf32>
    %16 = arith.truncf %15 : vector<32x128xf32> to vector<32x128xbf16>
    %cst_8 = arith.constant dense<0.000000e+00> : vector<32x128xf32>
    %17 = tpu.matmul %1, %16, %cst_8 {dimension_numbers = #tpu.dot_dimension_numbers<[1], [0], [0], [1], [0, 0, 1, 1], [], []>} : vector<32x32xbf16>, vector<32x128xbf16>, vector<32x128xf32> -> vector<32x128xf32>
    %18 = vector.broadcast %4 : vector<32x1xf32> to vector<32x128xf32>
    %19 = arith.addf %17, %18 : vector<32x128xf32>
    %20 = math.tanh %19 : vector<32x128xf32>
    %21 = vector.broadcast %5 : vector<32x1xf32> to vector<32x128xf32>
    %22 = arith.mulf %20, %21 : vector<32x128xf32>
    %cst_9 = arith.constant dense<0.000000e+00> : vector<128xf32>
    %23 = vector.multi_reduction <add>, %22, %cst_9 [0] : vector<32x128xf32> to vector<128xf32>
    %24 = vector.shape_cast %23 : vector<128xf32> to vector<1x128xf32>
    %25 = vector.broadcast %6 : f32 to vector<1x128xf32>
    %26 = arith.addf %24, %25 : vector<1x128xf32>
    %c0_10 = arith.constant 0 : index
    %27 = arith.index_cast %8 : i32 to index
    %28 = vector.load %arg6[%c0_10, %27] : memref<1x256xf32, #tpu.memory_space<vmem>>, vector<1x128xf32>
    tpu.vector_store %arg6[%c0_10, %27], %26 {strides = array<i32>} : memref<1x256xf32, #tpu.memory_space<vmem>>, vector<1x128xf32>,
    %c1_i32 = arith.constant 1 : i32
    %c128_i32_11 = arith.constant 128 : i32
    %29 = arith.muli %c1_i32, %c128_i32_11 : i32
    %30 = tpu.assume_multiple %29, 128 : i32
    %c0_12 = arith.constant 0 : index
    %31 = arith.index_cast %30 : i32 to index
    %32 = vector.load %arg1[%c0_12, %31] : memref<5x256xf32, #tpu.memory_space<vmem>>, vector<5x128xf32>
    %33 = arith.truncf %32 : vector<5x128xf32> to vector<5x128xbf16>
    %cst_13 = arith.constant dense<0.000000e+00> : vector<32x128xf32>
    %34 = tpu.matmul %0, %33, %cst_13 {dimension_numbers = #tpu.dot_dimension_numbers<[1], [0], [0], [1], [0, 0, 1, 1], [], []>} : vector<32x5xbf16>, vector<5x128xbf16>, vector<32x128xf32> -> vector<32x128xf32>
    %35 = vector.broadcast %3 : vector<32x1xf32> to vector<32x128xf32>
    %36 = arith.addf %34, %35 : vector<32x128xf32>
    %37 = math.tanh %36 : vector<32x128xf32>
    %38 = arith.truncf %37 : vector<32x128xf32> to vector<32x128xbf16>
    %cst_14 = arith.constant dense<0.000000e+00> : vector<32x128xf32>
    %39 = tpu.matmul %1, %38, %cst_14 {dimension_numbers = #tpu.dot_dimension_numbers<[1], [0], [0], [1], [0, 0, 1, 1], [], []>} : vector<32x32xbf16>, vector<32x128xbf16>, vector<32x128xf32> -> vector<32x128xf32>
    %40 = vector.broadcast %4 : vector<32x1xf32> to vector<32x128xf32>
    %41 = arith.addf %39, %40 : vector<32x128xf32>
    %42 = math.tanh %41 : vector<32x128xf32>
    %43 = vector.broadcast %5 : vector<32x1xf32> to vector<32x128xf32>
    %44 = arith.mulf %42, %43 : vector<32x128xf32>
    %cst_15 = arith.constant dense<0.000000e+00> : vector<128xf32>
    %45 = vector.multi_reduction <add>, %44, %cst_15 [0] : vector<32x128xf32> to vector<128xf32>
    %46 = vector.shape_cast %45 : vector<128xf32> to vector<1x128xf32>
    %47 = vector.broadcast %6 : f32 to vector<1x128xf32>
    %48 = arith.addf %46, %47 : vector<1x128xf32>
    %c0_16 = arith.constant 0 : index
    %49 = arith.index_cast %30 : i32 to index
    %50 = vector.load %arg6[%c0_16, %49] : memref<1x256xf32, #tpu.memory_space<vmem>>, vector<1x128xf32>
    tpu.vector_store %arg6[%c0_16, %49], %48 {strides = array<i32>} : memref<1x256xf32, #tpu.memory_space<vmem>>, vector<1x128xf32>,
    %c2_i32 = arith.constant 2 : i32
    return
  }
  func.func @transform_0(%arg0: i32) -> (i32, i32) {
    %c0_i32 = arith.constant 0 : i32
    %c0_i32_0 = arith.constant 0 : i32
    return %c0_i32, %arg0 : i32, i32
  }
  func.func @transform_1(%arg0: i32) -> (i32, i32) {
    %c0_i32 = arith.constant 0 : i32
    %c0_i32_0 = arith.constant 0 : i32
    %c0_i32_1 = arith.constant 0 : i32
    return %c0_i32, %c0_i32_0 : i32, i32
  }
  func.func @transform_2(%arg0: i32) -> (i32, i32) {
    %c0_i32 = arith.constant 0 : i32
    %c0_i32_0 = arith.constant 0 : i32
    %c0_i32_1 = arith.constant 0 : i32
    return %c0_i32, %c0_i32_0 : i32, i32
  }
  func.func @transform_3(%arg0: i32) -> (i32, i32) {
    %c0_i32 = arith.constant 0 : i32
    %c0_i32_0 = arith.constant 0 : i32
    %c0_i32_1 = arith.constant 0 : i32
    return %c0_i32, %c0_i32_0 : i32, i32
  }
  func.func @transform_4(%arg0: i32) -> (i32, i32) {
    %c0_i32 = arith.constant 0 : i32
    %c0_i32_0 = arith.constant 0 : i32
    %c0_i32_1 = arith.constant 0 : i32
    return %c0_i32, %c0_i32_0 : i32, i32
  }
  func.func @transform_5(%arg0: i32) -> (i32, i32) {
    %c0_i32 = arith.constant 0 : i32
    %c0_i32_0 = arith.constant 0 : i32
    return %c0_i32, %arg0 : i32, i32
  }
}

</mosaic_0001>

<llo_original>
// kernel: tpu_custom_call.1
$region0: #{tpu_custom_call.1}
  #allocation0 [shape = 'u32[]', space=smem, size = 0x4, offset = 0x4, fixed_abs, tag = 'smem constant byte address 0x4 - core index']
  #allocation1 [shape = 'u32[72,128]{1,0:T(1,128)}', space=vmem, size = 0x9000, scoped, tag = 'internal scratch']
  #allocation2 [shape = 'f32[1,1]{1,0:T(1,128)S(6)}', space=smem, size = 0x200, scoped, tag = 'scoped memory for tpu_custom_call.1']
  %s0 = inlined_call_operand.vmem [shape: f32[5,300], index: 0, kind: input, shape index: {}]
  %s1 = inlined_call_operand.vmem [shape: bf16[32,5], index: 1, kind: input, shape index: {}]
  %s2 = inlined_call_operand.vmem [shape: bf16[32,32], index: 2, kind: input, shape index: {}]
  %s3 = inlined_call_operand.vmem [shape: f32[32,3], index: 3, kind: input, shape index: {}]
  %s4 = inlined_call_operand.<no memory space> [shape: f32[1,1], index: 4, kind: input, shape index: {}]
  %s5 = inlined_call_operand.hbm [shape: f32[1,512], index: 5, kind: output, shape index: {}]
  %s6 = sld [smem:[#allocation0]]
  $region53: #{tpu_custom_call.1} parent=0
    _
  %s8 = ssub.s32 1, %s6
  %s9 = scalar_select 0, %s8, %s6
  %10 = sst [smem:[#allocation2]] %s4
  $region1: #{tpu_custom_call.1} parent=0
    #allocation3 [shape = 'u8[2048]{0}', space=vmem, size = 0x800, scoped, tag = 'output window, operand 0']
    #allocation4 [shape = 's32[2]{0}', space=sflag, size = 0x8, scoped, tag = 'scoped memory for tpu_custom_call.1']
    %11 = vsyncpa [#allocation4], 0
    %s12 = scalar_lea.sflag [#allocation4], 1
    %13 = vsyncpa %s12, 0
    loop: start=0, step=1, limit=4
    $region2: #{tpu_custom_call.1} parent=1 // loop_pre_header
      _
    $region3: #{tpu_custom_call.1} parent=1 // loop_header
      %s15 = sphi 0, %s19
      %p16 = scmp.ge.s32.totalorder %s15, 4
      %s25 = sphi 0, %s27
      %s28 = sphi 0, %s25
      %s29 = sphi 0, %s28
      %s45 = sphi 0, %s29
      %s49 = sphi 0, %s49
      %s51 = sphi 0, %s49
      %s52 = sphi 0, %s51
      %s66 = sphi 0, %s52
      %s70 = sphi 0, %s70
      %s72 = sphi 0, %s70
      %s73 = sphi 0, %s72
      %s87 = sphi 0, %s73
      %s91 = sphi 0, %s91
      %s93 = sphi 0, %s91
      %s94 = sphi 0, %s93
      %s108 = sphi 0, %s94
      %s112 = sphi 0, %s112
      %s114 = sphi 0, %s112
      %s115 = sphi 0, %s114
      %s129 = sphi 0, %s115
      %s135 = sphi 0, %s137
      %s138 = sphi 0, %s135
      %s139 = sphi 0, %s138
      %s155 = sphi 0, %s139
    $region4: #{tpu_custom_call.1} parent=1 // loop_header_branch
      %18 = sbr.rel (%p16) target = $region8
    $region5: #{tpu_custom_call.1} parent=1 // loop_body
      %s20 = ssub.s32 %s15, 1
      %s21 = ssub.s32 %s15, 2
      %s22 = sadd.s32 %s15, 1
      %s23 = ssub.s32 %s15, %s22
      %p24 = scmp.eq.s32.totalorder %s23, 0
      %s26 = sadd.s32 %s25, 1
      %s27 = scalar_select %p24, %s25, %s26
      %p30 = pneg %p24
      %p31 = scmp.eq.s32.totalorder %s15, 1
      %p32 = por %p30, %p31
      %p33 = scmp.ne.s32.totalorder %s25, %s28
      %p34 = scmp.eq.s32.totalorder %s15, 0
      %p35 = por %p33, %p34
      %p36 = scmp.ne.s32.totalorder %s25, %s28
      %p37 = scmp.eq.s32.totalorder %s20, 1
      %p38 = por %p36, %p37
      %p39 = scmp.ne.s32.totalorder %s28, %s29
      %p40 = scmp.eq.s32.totalorder %s20, 0
      %p41 = por %p39, %p40
      %p42 = scmp.ne.s32.totalorder %s28, %s29
      %p43 = scmp.eq.s32.totalorder %s21, 1
      %p44 = por %p42, %p43
      %p46 = scmp.ne.s32.totalorder %s29, %s45
      %p47 = scmp.eq.s32.totalorder %s21, 0
      %p48 = por %p46, %p47
      %s50 = sadd.s32 %s49, 1
      %p53 = scmp.eq.s32.totalorder %s15, 1
      %p54 = scmp.ne.s32.totalorder %s49, %s51
      %p55 = scmp.eq.s32.totalorder %s15, 0
      %p56 = por %p54, %p55
      %p57 = scmp.ne.s32.totalorder %s49, %s51
      %p58 = scmp.eq.s32.totalorder %s20, 1
      %p59 = por %p57, %p58
      %p60 = scmp.ne.s32.totalorder %s51, %s52
      %p61 = scmp.eq.s32.totalorder %s20, 0
      %p62 = por %p60, %p61
      %p63 = scmp.ne.s32.totalorder %s51, %s52
      %p64 = scmp.eq.s32.totalorder %s21, 1
      %p65 = por %p63, %p64
      %p67 = scmp.ne.s32.totalorder %s52, %s66
      %p68 = scmp.eq.s32.totalorder %s21, 0
      %p69 = por %p67, %p68
      %s71 = sadd.s32 %s70, 1
      %p74 = scmp.eq.s32.totalorder %s15, 1
      %p75 = scmp.ne.s32.totalorder %s70, %s72
      %p76 = scmp.eq.s32.totalorder %s15, 0
      %p77 = por %p75, %p76
      %p78 = scmp.ne.s32.totalorder %s70, %s72
      %p79 = scmp.eq.s32.totalorder %s20, 1
      %p80 = por %p78, %p79
      %p81 = scmp.ne.s32.totalorder %s72, %s73
      %p82 = scmp.eq.s32.totalorder %s20, 0
      %p83 = por %p81, %p82
      %p84 = scmp.ne.s32.totalorder %s72, %s73
      %p85 = scmp.eq.s32.totalorder %s21, 1
      %p86 = por %p84, %p85
      %p88 = scmp.ne.s32.totalorder %s73, %s87
      %p89 = scmp.eq.s32.totalorder %s21, 0
      %p90 = por %p88, %p89
      %s92 = sadd.s32 %s91, 1
      %p95 = scmp.eq.s32.totalorder %s15, 1
      %p96 = scmp.ne.s32.totalorder %s91, %s93
      %p97 = scmp.eq.s32.totalorder %s15, 0
      %p98 = por %p96, %p97
      %p99 = scmp.ne.s32.totalorder %s91, %s93
      %p100 = scmp.eq.s32.totalorder %s20, 1
      %p101 = por %p99, %p100
      %p102 = scmp.ne.s32.totalorder %s93, %s94
      %p103 = scmp.eq.s32.totalorder %s20, 0
      %p104 = por %p102, %p103
      %p105 = scmp.ne.s32.totalorder %s93, %s94
      %p106 = scmp.eq.s32.totalorder %s21, 1
      %p107 = por %p105, %p106
      %p109 = scmp.ne.s32.totalorder %s94, %s108
      %p110 = scmp.eq.s32.totalorder %s21, 0
      %p111 = por %p109, %p110
      %s113 = sadd.s32 %s112, 1
      %p116 = scmp.eq.s32.totalorder %s15, 1
      %p117 = scmp.ne.s32.totalorder %s112, %s114
      %p118 = scmp.eq.s32.totalorder %s15, 0
      %p119 = por %p117, %p118
      %p120 = scmp.ne.s32.totalorder %s112, %s114
      %p121 = scmp.eq.s32.totalorder %s20, 1
      %p122 = por %p120, %p121
      %p123 = scmp.ne.s32.totalorder %s114, %s115
      %p124 = scmp.eq.s32.totalorder %s20, 0
      %p125 = por %p123, %p124
      %p126 = scmp.ne.s32.totalorder %s114, %s115
      %p127 = scmp.eq.s32.totalorder %s21, 1
      %p128 = por %p126, %p127
      %p130 = scmp.ne.s32.totalorder %s115, %s129
      %p131 = scmp.eq.s32.totalorder %s21, 0
      %p132 = por %p130, %p131
      %s133 = ssub.s32 %s15, %s22
      %p134 = scmp.eq.s32.totalorder %s133, 0
      %s136 = sadd.s32 %s135, 1
      %s137 = scalar_select %p134, %s135, %s136
      %p140 = pneg %p134
      %p141 = scmp.eq.s32.totalorder %s15, 1
      %p142 = por %p140, %p141
      %p143 = scmp.ne.s32.totalorder %s135, %s138
      %p144 = scmp.eq.s32.totalorder %s15, 0
      %p145 = por %p143, %p144
      %p146 = scmp.ne.s32.totalorder %s135, %s138
      %p147 = scmp.eq.s32.totalorder %s20, 1
      %p148 = por %p146, %p147
      %p149 = scmp.ne.s32.totalorder %s138, %s139
      %p150 = scmp.eq.s32.totalorder %s20, 0
      %p151 = por %p149, %p150
      %p152 = scmp.ne.s32.totalorder %s138, %s139
      %p153 = scmp.eq.s32.totalorder %s21, 1
      %p154 = por %p152, %p153
      %p156 = scmp.ne.s32.totalorder %s139, %s155
      %p157 = scmp.eq.s32.totalorder %s21, 0
      %p158 = por %p156, %p157
      %p159 = scmp.le.s32.totalorder 1, %s15
      %p160 = scmp.lt.s32.totalorder %s15, 3
      %p161 = pnand %p159, %p160
      %p162 = pneg %p161
      // Predicated region
      $region9: #{tpu_custom_call.1} parent=5 // pred_check
        _
      $region10: #{tpu_custom_call.1} parent=5 // pred_check_branch
        %164 = sbr.rel (%p161) target = $region12
      $region11: #{tpu_custom_call.1} parent=5 // pred_region
        %s165 = ssub.s32 %s15, 1
        // Predicated region
        $region13: #{tpu_custom_call.1} parent=11 // pred_check
          %p166 = pneg %p62
        $region14: #{tpu_custom_call.1} parent=11 // pred_check_branch
          %168 = sbr.rel (%p166) target = $region16
        $region15: #{tpu_custom_call.1} parent=11 // pred_region
          _
        $region16: #{tpu_custom_call.1} parent=11 // pred_fallthru
          _
        // Predicated region
        $region17: #{tpu_custom_call.1} parent=11 // pred_check
          %p169 = pneg %p83
        $region18: #{tpu_custom_call.1} parent=11 // pred_check_branch
          %171 = sbr.rel (%p169) target = $region20
        $region19: #{tpu_custom_call.1} parent=11 // pred_region
          _
        $region20: #{tpu_custom_call.1} parent=11 // pred_fallthru
          _
        // Predicated region
        $region21: #{tpu_custom_call.1} parent=11 // pred_check
          %p172 = pneg %p104
        $region22: #{tpu_custom_call.1} parent=11 // pred_check_branch
          %174 = sbr.rel (%p172) target = $region24
        $region23: #{tpu_custom_call.1} parent=11 // pred_region
          _
        $region24: #{tpu_custom_call.1} parent=11 // pred_fallthru
          _
        // Predicated region
        $region25: #{tpu_custom_call.1} parent=11 // pred_check
          %p175 = pneg %p125
        $region26: #{tpu_custom_call.1} parent=11 // pred_check_branch
          %177 = sbr.rel (%p175) target = $region28
        $region27: #{tpu_custom_call.1} parent=11 // pred_region
          _
        $region28: #{tpu_custom_call.1} parent=11 // pred_fallthru
          _
      $region12: #{tpu_custom_call.1} parent=5 // pred_fallthru
        _
      %p178 = scmp.lt.s32.totalorder %s15, 2
      // Predicated region
      $region29: #{tpu_custom_call.1} parent=5 // pred_check
        %p179 = pneg %p178
      $region30: #{tpu_custom_call.1} parent=5 // pred_check_branch
        %181 = sbr.rel (%p179) target = $region32
      $region31: #{tpu_custom_call.1} parent=5 // pred_region
        // Predicated region
        $region33: #{tpu_custom_call.1} parent=31 // pred_check
          %p182 = pneg %p35
        $region34: #{tpu_custom_call.1} parent=31 // pred_check_branch
          %184 = sbr.rel (%p182) target = $region36
        $region35: #{tpu_custom_call.1} parent=31 // pred_region
          %s185 = smul.u32 2, %s15
          %s186 = ssub.s32 3, %s185
          %p187 = scmp.lt.s32.totalorder %s186, 2
          %s188 = scalar_select %p187, %s186, 2
          %s189 = smul.u32 8, %s188
          %p190 = scmp.lt.s32.totalorder %s185, 2
          %s191 = scalar_select %p190, %s185, 2
          %s192 = smul.addr %s191, 8
          %s193 = scalar_lea.vmem %s0, %s192
          %s194 = smul.u32 2, %s15
          %s195 = ssub.s32 3, %s194
          %p196 = scmp.lt.s32.totalorder %s195, 2
          %s197 = scalar_select %p196, %s195, 2
          %s198 = smul.u32 8, %s197
        $region36: #{tpu_custom_call.1} parent=31 // pred_fallthru
          _
      $region32: #{tpu_custom_call.1} parent=5 // pred_fallthru
        _
      %p199 = scmp.le.s32.totalorder 1, %s15
      %p200 = scmp.lt.s32.totalorder %s15, 3
      %p201 = pnand %p199, %p200
      %p202 = pneg %p201
      // Predicated region
      $region37: #{tpu_custom_call.1} parent=5 // pred_check
        _
      $region38: #{tpu_custom_call.1} parent=5 // pred_check_branch
        %204 = sbr.rel (%p201) target = $region40
      $region39: #{tpu_custom_call.1} parent=5 // pred_region
        %s205 = ssub.s32 %s15, 1
        %s206 = smul.u32 2, %s20
        %s207 = ssub.s32 3, %s206
        %p208 = scmp.lt.s32.totalorder %s207, 2
        %s209 = scalar_select %p208, %s207, 2
        %s210 = smul.u32 8, %s209
        %p211 = scmp.lt.s32.totalorder %s206, 2
        %s212 = scalar_select %p211, %s206, 2
        %s213 = smul.addr %s212, 8
        %s214 = scalar_lea.vmem %s0, %s213
        %p215 = pneg %p41
        %p216 = pneg %p38
        %p217 = pneg %p62
        %p218 = pneg %p59
        %p219 = pneg %p83
        %p220 = pneg %p80
        %p221 = pneg %p104
        %p222 = pneg %p101
        %p223 = pneg %p125
        %p224 = pneg %p122
        %p225 = pneg %p151
        %p226 = pneg %p148
        %s227 = sand.u32 %s138, 1
        %s228 = scalar_lea.sflag [#allocation4], %s227
        %s229 = sand.u32 %s138, 1
        %s230 = smul.addr %s229, 2
        %s231 = scalar_lea.vmem [#allocation3], %s230
        %s232 = smul.u32 2, %s20
        %s233 = ssub.s32 3, %s232
        %p234 = scmp.lt.s32.totalorder %s233, 2
        %s235 = scalar_select %p234, %s233, 2
        %s236 = smul.u32 8, %s235
        %p237 = scmp.lt.s32.totalorder %s232, 2
        %s238 = scalar_select %p237, %s232, 2
        %s239 = smul.addr %s238, 8
        %s240 = scalar_lea.vmem %s0, %s239
        %s241 = smul.u32 2, %s20
        %s242 = ssub.s32 3, %s241
        %p243 = scmp.lt.s32.totalorder %s242, 2
        %s244 = scalar_select %p243, %s242, 2
        %s245 = smul.u32 8, %s244
        %s246 = smul.u32 2, %s20
        %v248 = vld [vmem:[%s1] sm:$0xf]
        %v249 = vld [vmem:[%s1 + $0x4] sm:$0xf]
        %v250 = vld [vmem:[%s1 + $0x8] sm:$0xf]
        %v251 = vld [vmem:[%s1 + $0xc] sm:$0xf]
        %v252 = vld [vmem:[%s2] sm:$0xf]
        %v253 = vld [vmem:[%s2 + $0x4] sm:$0xf]
        %v254 = vld [vmem:[%s2 + $0x8] sm:$0xf]
        %v255 = vld [vmem:[%s2 + $0xc] sm:$0xf]
        %v256 = vld [vmem:[%s3] sm:$0xff]
        %v257 = vld [vmem:[%s3 + $0x8] sm:$0xff]
        %v258 = vld [vmem:[%s3 + $0x10] sm:$0xff]
        %v259 = vld [vmem:[%s3 + $0x18] sm:$0xff]
        %s260 = sld [smem:[#allocation2]]
        %v261 = vld [vmem:[%s240] sm:$0x1f]
        %v262 = vpack.c.bf16 %v261, %v261
        %264 = vset.pattern.permute.xlu0 0
        %265 = vperm.xlu0 %264, %v256
        %v266 = vpop.permute.xlu0 %265
        %269 = vset.pattern.permute.xlu0 0
        %270 = vperm.xlu0 %269, %v257
        %v271 = vpop.permute.xlu0 %270
        %274 = vset.pattern.permute.xlu0 0
        %275 = vperm.xlu0 %274, %v258
        %v276 = vpop.permute.xlu0 %275
        %279 = vset.pattern.permute.xlu0 0
        %280 = vperm.xlu0 %279, %v259
        %v281 = vpop.permute.xlu0 %280
        %v287 = vunpack.c.l.b16 %v248
        %v288 = vunpack.c.l.b16 %v249
        %v289 = vunpack.c.l.b16 %v250
        %v290 = vunpack.c.l.b16 %v251
        %v291 = vpack.c.b16 %v288, %v287
        %v292 = vpack.c.b16 %v290, %v289
        %vm293 = vcmask 39936
        %v295 = vsel %vm293, %v291, 0
        %v298 = vsel %vm293, %v292, 0
        %vm300 = vcmask 1041408
        %vm301 = vcmask 1042432
        %v302 = vsel %vm300, 4294967295, 65535
        %v303 = vsel %vm301, %v302, 0
        %v305 = vand.u32 %v262, %v303
        %307 = vmatpush.bf16.msra.mxu0 0
        %308 = vmatpush.bf16.msra.mxu0 0
        %309 = vmatpush.bf16.msra.mxu0 0
        %310 = vmatpush.bf16.msra.mxu0 0
        %311 = vmatpush.bf16.msra.mxu0 0
        %312 = vmatpush.bf16.msra.mxu0 0
        %313 = vmatpush.bf16.msra.mxu0 0
        %314 = vmatpush.bf16.msra.mxu0 %v305
        %315 = vmatmul.bf16.gmra.mxu0 %v295
        %v316 = vpop.f32.mrf.mxu0
        %v317 = vadd.f32 %v266, %v316
        %v318 = vpop.f32.mrf.mxu0
        %v319 = vadd.f32 %v271, %v318
        %320 = vmatmul.bf16.gmra.mxu0 %v298
        %v321 = vpop.f32.mrf.mxu0
        %v322 = vadd.f32 %v276, %v321
        %v323 = vpop.f32.mrf.mxu0
        %v324 = vadd.f32 %v281, %v323
        %325 = vdwg.mxu0
        %v326 = vtanh.pop %v317
        %v327 = vtanh.pop %v319
        %v328 = vtanh.pop %v322
        %v329 = vtanh.pop %v324
        %v330 = vpack.c.bf16 %v327, %v326
        %v331 = vpack.c.bf16 %v329, %v328
        %332 = vset.pattern.permute.xlu0 1
        %333 = vperm.xlu0 %332, %v256
        %v334 = vpop.permute.xlu0 %333
        %336 = vset.pattern.permute.xlu0 1
        %337 = vperm.xlu0 %336, %v257
        %v338 = vpop.permute.xlu0 %337
        %340 = vset.pattern.permute.xlu0 1
        %341 = vperm.xlu0 %340, %v258
        %v342 = vpop.permute.xlu0 %341
        %344 = vset.pattern.permute.xlu0 1
        %345 = vperm.xlu0 %344, %v259
        %v346 = vpop.permute.xlu0 %345
        %v352 = vunpack.c.l.b16 %v252
        %v353 = vunpack.c.l.b16 %v253
        %v354 = vunpack.c.l.b16 %v254
        %v355 = vunpack.c.l.b16 %v255
        %v356 = vpack.c.b16 %v353, %v352
        %v357 = vpack.c.b16 %v355, %v354
        %vm358 = vcmask 261120
        %v360 = vsel %vm358, %v356, 0
        %v363 = vsel %vm358, %v357, 0
        %365 = vmatpush.bf16.msra.mxu0 0
        %366 = vmatpush.bf16.msra.mxu0 0
        %367 = vmatpush.bf16.msra.mxu0 0
        %368 = vmatpush.bf16.msra.mxu0 0
        %369 = vmatpush.bf16.msra.mxu0 0
        %370 = vmatpush.bf16.msra.mxu0 0
        %371 = vmatpush.bf16.msra.mxu0 %v331
        %372 = vmatpush.bf16.msra.mxu0 %v330
        %373 = vmatmul.bf16.gmra.mxu0 %v360
        %v374 = vpop.f32.mrf.mxu0
        %v375 = vadd.f32 %v334, %v374
        %v376 = vpop.f32.mrf.mxu0
        %v377 = vadd.f32 %v338, %v376
        %378 = vmatmul.bf16.gmra.mxu0 %v363
        %v379 = vpop.f32.mrf.mxu0
        %v380 = vadd.f32 %v342, %v379
        %v381 = vpop.f32.mrf.mxu0
        %v382 = vadd.f32 %v346, %v381
        %383 = vdwg.mxu0
        %v384 = vtanh.pop %v375
        %v385 = vtanh.pop %v377
        %v386 = vtanh.pop %v380
        %v387 = vtanh.pop %v382
        %388 = vset.pattern.permute.xlu0 2
        %389 = vperm.xlu0 %388, %v256
        %v390 = vpop.permute.xlu0 %389
        %392 = vset.pattern.permute.xlu0 2
        %393 = vperm.xlu0 %392, %v257
        %v394 = vpop.permute.xlu0 %393
        %396 = vset.pattern.permute.xlu0 2
        %397 = vperm.xlu0 %396, %v258
        %v398 = vpop.permute.xlu0 %397
        %400 = vset.pattern.permute.xlu0 2
        %401 = vperm.xlu0 %400, %v259
        %v402 = vpop.permute.xlu0 %401
        %v404 = vmul.f32 %v384, %v390
        %v405 = vmul.f32 %v385, %v394
        %v406 = vmul.f32 %v386, %v398
        %v407 = vmul.f32 %v387, %v402
        %v408 = vadd.f32 %v404, %v405
        %v409 = vadd.f32 %v408, %v406
        %v410 = vadd.f32 %v409, %v407
        %v411 = vrot.slane %v410, 4
        %v412 = vadd.f32 %v410, %v411
        %v413 = vrot.slane %v412, 2
        %v414 = vadd.f32 %v412, %v413
        %v415 = vrot.slane %v414, 1
        %v416 = vadd.f32 %v414, %v415
        %v417 = vstv %s260
        %v418 = vadd.f32 %v416, %v417
        %v419 = vlaneseq
        %vm420 = vcmp.ge.s32.totalorder %v419, 0
        %vm421 = vcmp.lt.s32.totalorder %v419, 128
        %vm422 = vmand %vm420, %vm421
        %423 = vst.msk [vmem:[%s231] sm:$0x1] %vm422, %v418
        %s424 = scalar_lea.vmem %s240, 8
        %v425 = vld [vmem:[%s424] sm:$0x1f]
        %v426 = vpack.c.bf16 %v425, %v425
        %v428 = vand.u32 %v426, %v303
        %430 = vmatpush.bf16.msra.mxu0 0
        %431 = vmatpush.bf16.msra.mxu0 0
        %432 = vmatpush.bf16.msra.mxu0 0
        %433 = vmatpush.bf16.msra.mxu0 0
        %434 = vmatpush.bf16.msra.mxu0 0
        %435 = vmatpush.bf16.msra.mxu0 0
        %436 = vmatpush.bf16.msra.mxu0 0
        %437 = vmatpush.bf16.msra.mxu0 %v428
        %438 = vmatmul.bf16.gmra.mxu0 %v295
        %v439 = vpop.f32.mrf.mxu0
        %v440 = vadd.f32 %v266, %v439
        %v441 = vpop.f32.mrf.mxu0
        %v442 = vadd.f32 %v271, %v441
        %443 = vmatmul.bf16.gmra.mxu0 %v298
        %v444 = vpop.f32.mrf.mxu0
        %v445 = vadd.f32 %v276, %v444
        %v446 = vpop.f32.mrf.mxu0
        %v447 = vadd.f32 %v281, %v446
        %448 = vdwg.mxu0
        %v449 = vtanh.pop %v440
        %v450 = vtanh.pop %v442
        %v451 = vtanh.pop %v445
        %v452 = vtanh.pop %v447
        %v453 = vpack.c.bf16 %v450, %v449
        %v454 = vpack.c.bf16 %v452, %v451
        %455 = vmatpush.bf16.msra.mxu0 0
        %456 = vmatpush.bf16.msra.mxu0 0
        %457 = vmatpush.bf16.msra.mxu0 0
        %458 = vmatpush.bf16.msra.mxu0 0
        %459 = vmatpush.bf16.msra.mxu0 0
        %460 = vmatpush.bf16.msra.mxu0 0
        %461 = vmatpush.bf16.msra.mxu0 %v454
        %462 = vmatpush.bf16.msra.mxu0 %v453
        %463 = vmatmul.bf16.gmra.mxu0 %v360
        %v464 = vpop.f32.mrf.mxu0
        %v465 = vadd.f32 %v334, %v464
        %v466 = vpop.f32.mrf.mxu0
        %v467 = vadd.f32 %v338, %v466
        %468 = vmatmul.bf16.gmra.mxu0 %v363
        %v469 = vpop.f32.mrf.mxu0
        %v470 = vadd.f32 %v342, %v469
        %v471 = vpop.f32.mrf.mxu0
        %v472 = vadd.f32 %v346, %v471
        %473 = vdwg.mxu0
        %v474 = vtanh.pop %v465
        %v475 = vtanh.pop %v467
        %v476 = vtanh.pop %v470
        %v477 = vtanh.pop %v472
        %v478 = vmul.f32 %v474, %v390
        %v479 = vmul.f32 %v475, %v394
        %v480 = vmul.f32 %v476, %v398
        %v481 = vmul.f32 %v477, %v402
        %v482 = vadd.f32 %v478, %v479
        %v483 = vadd.f32 %v482, %v480
        %v484 = vadd.f32 %v483, %v481
        %v485 = vrot.slane %v484, 4
        %v486 = vadd.f32 %v484, %v485
        %v487 = vrot.slane %v486, 2
        %v488 = vadd.f32 %v486, %v487
        %v489 = vrot.slane %v488, 1
        %v490 = vadd.f32 %v488, %v489
        %v491 = vadd.f32 %v490, %v417
        %s492 = scalar_lea.vmem %s231, 1 [#allocation3]
        %493 = vst.msk [vmem:[%s492] sm:$0x1] %vm422, %v491
        %s494 = sand.u32 %s138, 1
        %s495 = scalar_lea.sflag [#allocation4], %s494
        %s496 = sand.u32 %s138, 1
        %s497 = smul.addr %s496, 2
        %s498 = scalar_lea.vmem [#allocation3], %s497
        // Predicated region
        $region41: #{tpu_custom_call.1} parent=39 // pred_check
          %p499 = pneg %p148
        $region42: #{tpu_custom_call.1} parent=39 // pred_check_branch
          %501 = sbr.rel (%p499) target = $region44
        $region43: #{tpu_custom_call.1} parent=39 // pred_region
          %s502 = smul.u32 2, %s20
          %504 = vsyncadd %s495, 0
          %s505 = scalar_lea.hbm %s5, %s502
          %s507 = sshll.u32 %s498, 4
          %s508 = int_to_ptr.vmem [resolvable:$true] %s507
          %s509 = sshll.u32 %s505, 4
          %s510 = int_to_ptr.hbm [resolvable:$true] %s509
          %512 = dma.vmem_to_hbm [thread:$0]  %s508, 32, %s510, %s495
        $region44: #{tpu_custom_call.1} parent=39 // pred_fallthru
          _
      $region40: #{tpu_custom_call.1} parent=5 // pred_fallthru
        _
      %p513 = scmp.le.s32.totalorder 2, %s15
      // Predicated region
      $region45: #{tpu_custom_call.1} parent=5 // pred_check
        %p514 = pneg %p513
      $region46: #{tpu_custom_call.1} parent=5 // pred_check_branch
        %516 = sbr.rel (%p514) target = $region48
      $region47: #{tpu_custom_call.1} parent=5 // pred_region
        %s517 = ssub.s32 %s15, 2
        // Predicated region
        $region49: #{tpu_custom_call.1} parent=47 // pred_check
          %p518 = pneg %p154
        $region50: #{tpu_custom_call.1} parent=47 // pred_check_branch
          %520 = sbr.rel (%p518) target = $region52
        $region51: #{tpu_custom_call.1} parent=47 // pred_region
          %s521 = sand.u32 %s139, 1
          %s522 = scalar_lea.sflag [#allocation4], %s521
          %s523 = sand.u32 %s139, 1
          %s524 = smul.addr %s523, 2
          %s525 = scalar_lea.vmem [#allocation3], %s524
          %527 = dma.done %s522, 32
        $region52: #{tpu_custom_call.1} parent=47 // pred_fallthru
          _
      $region48: #{tpu_custom_call.1} parent=5 // pred_fallthru
        _
    $region6: #{tpu_custom_call.1} parent=1 // loop_footer
      %s19 = sadd.s32 1, %s15
    $region7: #{tpu_custom_call.1} parent=1 // loop_footer_branch
      %14 = sbr.rel target = $region3
    $region8: #{tpu_custom_call.1} parent=1 // loop_exit
      _
    %528 = vsyncpa [#allocation4], 1
    %s529 = scalar_lea.sflag [#allocation4], 1
    %530 = vsyncpa %s529, 1

</llo_original>
